<compile_context>
chip_gen: v7x
topology: tpu7x:2x2x1
jax: 0.10.0
libtpu: 0.0.40
codegen_flags: <defaults>
</compile_context>

<pallas_src>
import functools
import math

import jax
import jax.numpy as jnp
from jax.experimental import pallas as pl
from jax.experimental.pallas import tpu as pltpu


def _xent_single_block_kernel(logits_ref, labels_ref, out_ref, *, n_rows, reduction):
    """Whole problem in one grid step: log_softmax + weighted sum + reduce."""
    x = logits_ref[...].astype(jnp.float32)
    y = labels_ref[...].astype(jnp.float32)
    m = jnp.max(x, axis=-1, keepdims=True)
    z = x - m
    lse = jnp.log(jnp.sum(jnp.exp(z), axis=-1, keepdims=True))
    # -labels * logprobs == labels * (lse - z)
    total = jnp.sum(y * (lse - z))
    if reduction == "mean":
        out_ref[0, 0] = total / n_rows
    else:  # "sum"
        out_ref[0, 0] = total


def _xent_tiled_kernel(logits_ref, labels_ref, out_ref, acc_ref, *, n_rows, reduction):
    """Row-tiled path: VMEM elementwise accumulator, single final scalar reduce."""
    i = pl.program_id(0)

    @pl.when(i == 0)
    def _():
        acc_ref[...] = jnp.zeros_like(acc_ref)

    x = logits_ref[...].astype(jnp.float32)
    y = labels_ref[...].astype(jnp.float32)
    m = jnp.max(x, axis=-1, keepdims=True)
    z = x - m
    lse = jnp.log(jnp.sum(jnp.exp(z), axis=-1, keepdims=True))
    # Elementwise accumulation on the VPU (no per-step scalar RMW chain).
    acc_ref[...] += y * (lse - z)

    @pl.when(i == pl.num_programs(0) - 1)
    def _():
        total = jnp.sum(acc_ref[...])   # one cross-lane reduce per kernel
        if reduction == "mean":
            out_ref[0, 0] = total / n_rows
        else:
            out_ref[0, 0] = total


def dense_cross_entropy(logits, labels, *, reduction="mean", block_rows=1024):
    """Pallas forward for DenseCrossEntropy ('mean' or 'sum' reduction)."""
    if reduction not in ("mean", "sum"):
        # TODO(synk): reduction='none' (unreduced per-row loss output) not
        # implemented in-kernel; only 'mean' (default) and 'sum' are supported.
        raise NotImplementedError("reduction must be 'mean' or 'sum'")
    assert logits.shape == labels.shape
    C = logits.shape[-1]
    n_rows = math.prod(logits.shape[:-1])
    x2 = logits.reshape(n_rows, C)   # view-only reshape; dtype cast is in-kernel
    y2 = labels.reshape(n_rows, C)

    if n_rows <= block_rows:
        # Single grid step, full-array block: no pipeline / accumulator overhead.
        out = pl.pallas_call(
            functools.partial(_xent_single_block_kernel,
                              n_rows=n_rows, reduction=reduction),
            out_shape=jax.ShapeDtypeStruct((1, 1), jnp.float32),
            grid_spec=pltpu.PrefetchScalarGridSpec(
                num_scalar_prefetch=0,
                grid=(1,),
                in_specs=[
                    pl.BlockSpec((n_rows, C), lambda i: (0, 0)),
                    pl.BlockSpec((n_rows, C), lambda i: (0, 0)),
                ],
                out_specs=pl.BlockSpec((1, 1), lambda i: (0, 0),
                                       memory_space=pltpu.SMEM),
            ),
            compiler_params=pltpu.CompilerParams(
                dimension_semantics=("arbitrary",)),
        )(x2, y2)
        return out[0, 0]

    # Row-tiled path for large inputs. The class axis stays whole per block.
    block_rows = max(8, 8 * (block_rows // 8))           # sublane alignment
    padded_rows = pl.cdiv(n_rows, block_rows) * block_rows
    if padded_rows != n_rows:
        pad = padded_rows - n_rows
        # Zero-label rows contribute exactly zero loss; divisor stays n_rows.
        x2 = jnp.pad(x2, ((0, pad), (0, 0)))
        y2 = jnp.pad(y2, ((0, pad), (0, 0)))
    num_tiles = padded_rows // block_rows

    out = pl.pallas_call(
        functools.partial(_xent_tiled_kernel, n_rows=n_rows, reduction=reduction),
        out_shape=jax.ShapeDtypeStruct((1, 1), jnp.float32),
        grid_spec=pltpu.PrefetchScalarGridSpec(
            num_scalar_prefetch=0,
            grid=(num_tiles,),
            in_specs=[
                pl.BlockSpec((block_rows, C), lambda i: (i, 0)),
                pl.BlockSpec((block_rows, C), lambda i: (i, 0)),
            ],
            out_specs=pl.BlockSpec((1, 1), lambda i: (0, 0),
                                   memory_space=pltpu.SMEM),
            scratch_shapes=[pltpu.VMEM((block_rows, C), jnp.float32)],
        ),
        compiler_params=pltpu.CompilerParams(
            dimension_semantics=("arbitrary",)),
    )(x2, y2)
    return out[0, 0]


def _dense_cross_entropy_ref(logits, labels, reduction="mean"):
    lp = jax.nn.log_softmax(logits.astype(jnp.float32), axis=-1)
    loss = jnp.sum(-labels.astype(jnp.float32) * lp, axis=-1)
    if reduction == "mean":
        return loss.mean()
    if reduction == "sum":
        return loss.sum()
    return loss


if __name__ == "__main__":
    key = jax.random.PRNGKey(0)
    k1, k2, k3, k4 = jax.random.split(key, 4)

    # Dense (soft-label) cross entropy: batch=2, seq=8, classes=32.
    logits = jax.random.normal(k1, (2, 8, 32), dtype=jnp.float32)
    labels = jax.nn.softmax(
        jax.random.normal(k2, (2, 8, 32), dtype=jnp.float32), axis=-1)

    loss = dense_cross_entropy(logits, labels)          # single-block path
    jax.block_until_ready(loss)
    ref = _dense_cross_entropy_ref(logits, labels)
    assert jnp.allclose(loss, ref, atol=1e-5, rtol=1e-5), (loss, ref)

    # Also exercise the row-tiled reduction path (grid > 1).
    logits2 = jax.random.normal(k3, (4, 16, 32), dtype=jnp.float32)
    labels2 = jax.nn.softmax(
        jax.random.normal(k4, (4, 16, 32), dtype=jnp.float32), axis=-1)
    loss2 = dense_cross_entropy(logits2, labels2, block_rows=8)
    jax.block_until_ready(loss2)
    ref2 = _dense_cross_entropy_ref(logits2, labels2)
    assert jnp.allclose(loss2, ref2, atol=1e-5, rtol=1e-5), (loss2, ref2)

    print("KERNEL_OK")
</pallas_src>

<mosaic_0001>
module attributes {stable_mosaic.version = 11 : i64} {
  func.func @_xent_single_block_kernel(%arg0: i32, %arg1: memref<16x32xf32, #tpu.memory_space<vmem>>, %arg2: memref<16x32xf32, #tpu.memory_space<vmem>>, %arg3: memref<1x1xf32, #tpu.memory_space<smem>>) attributes {dimension_semantics = [#tpu.dimension_semantics<arbitrary>], iteration_bounds = array<i64: 1>, scalar_prefetch = 0 : i64, scratch_operands = 0 : i64, tpu.core_type = #tpu.core_type<tc>, window_params = [{pipeline_mode = #tpu.pipeline_mode<synchronous>, transform_indices = @transform_0, window_bounds = array<i64: 16, 32>}, {pipeline_mode = #tpu.pipeline_mode<synchronous>, transform_indices = @transform_1, window_bounds = array<i64: 16, 32>}, {transform_indices = @transform_2, window_bounds = array<i64: 1, 1>}]} {
    %c0 = arith.constant 0 : index
    %c0_0 = arith.constant 0 : index
    %0 = vector.load %arg1[%c0, %c0_0] : memref<16x32xf32, #tpu.memory_space<vmem>>, vector<16x32xf32>
    %c0_1 = arith.constant 0 : index
    %c0_2 = arith.constant 0 : index
    %1 = vector.load %arg2[%c0_1, %c0_2] : memref<16x32xf32, #tpu.memory_space<vmem>>, vector<16x32xf32>
    %cst = arith.constant dense<0xFF800000> : vector<16xf32>
    %2 = vector.multi_reduction <maximumf>, %0, %cst [1] : vector<16x32xf32> to vector<16xf32>
    %3 = vector.shape_cast %2 : vector<16xf32> to vector<16x1xf32>
    %4 = vector.broadcast %3 : vector<16x1xf32> to vector<16x32xf32>
    %5 = arith.subf %0, %4 : vector<16x32xf32>
    %6 = math.exp %5 : vector<16x32xf32>
    %cst_3 = arith.constant dense<0.000000e+00> : vector<16xf32>
    %7 = vector.multi_reduction <add>, %6, %cst_3 [1] : vector<16x32xf32> to vector<16xf32>
    %8 = vector.shape_cast %7 : vector<16xf32> to vector<16x1xf32>
    %9 = math.log %8 : vector<16x1xf32>
    %10 = vector.broadcast %9 : vector<16x1xf32> to vector<16x32xf32>
    %11 = arith.subf %10, %5 : vector<16x32xf32>
    %12 = arith.mulf %1, %11 : vector<16x32xf32>
    %13 = vector.shape_cast %12 : vector<16x32xf32> to vector<1x16x32xf32>
    %cst_4 = arith.constant dense<0.000000e+00> : vector<1xf32>
    %14 = vector.multi_reduction <add>, %13, %cst_4 [1, 2] : vector<1x16x32xf32> to vector<1xf32>
    %15 = vector.shape_cast %14 : vector<1xf32> to vector<1x1x1xf32>
    %16 = vector.extract %15[0, 0, 0] : f32 from vector<1x1x1xf32>
    %cst_5 = arith.constant 1.600000e+01 : f32
    %17 = arith.divf %16, %cst_5 : f32
    %c0_6 = arith.constant 0 : index
    %c0_7 = arith.constant 0 : index
    %18 = memref.load %arg3[%c0_6, %c0_7] : memref<1x1xf32, #tpu.memory_space<smem>>
    memref.store %17, %arg3[%c0_6, %c0_7] : memref<1x1xf32, #tpu.memory_space<smem>>
    return
  }
  func.func @transform_0(%arg0: i32) -> (i32, i32) {
    %c0_i32 = arith.constant 0 : i32
    %c0_i32_0 = arith.constant 0 : i32
    %c0_i32_1 = arith.constant 0 : i32
    return %c0_i32, %c0_i32_0 : i32, i32
  }
  func.func @transform_1(%arg0: i32) -> (i32, i32) {
    %c0_i32 = arith.constant 0 : i32
    %c0_i32_0 = arith.constant 0 : i32
    %c0_i32_1 = arith.constant 0 : i32
    return %c0_i32, %c0_i32_0 : i32, i32
  }
  func.func @transform_2(%arg0: i32) -> (i32, i32) {
    %c0_i32 = arith.constant 0 : i32
    %c0_i32_0 = arith.constant 0 : i32
    %c0_i32_1 = arith.constant 0 : i32
    return %c0_i32, %c0_i32_0 : i32, i32
  }
}

</mosaic_0001>

<llo_original>
// kernel: tpu_custom_call.1
$region0: #{tpu_custom_call.1}
  #allocation0 [shape = 'u32[]', space=smem, size = 0x4, offset = 0x4, fixed_abs, tag = 'smem constant byte address 0x4 - core index']
  #allocation1 [shape = 'u32[144,128]{1,0:T(1,128)}', space=vmem, size = 0x12000, scoped, tag = 'internal scratch']
  %s0 = inlined_call_operand.hbm [shape: f32[16,32], index: 0, kind: input, shape index: {}]
  %s1 = inlined_call_operand.hbm [shape: f32[16,32], index: 1, kind: input, shape index: {}]
  %s2 = inlined_call_operand.hbm [shape: f32[1,1], index: 2, kind: output, shape index: {}]
  %s3 = sld [smem:[#allocation0]]
  $region26: #{tpu_custom_call.1} parent=0
    _
  %s5 = ssub.s32 1, %s3
  %s6 = scalar_select 0, %s5, %s3
  $region1: #{tpu_custom_call.1} parent=0
    #allocation2 [shape = 'u8[8192]{0}', space=vmem, size = 0x2000, scoped, tag = 'input window, operand 0, single buffered']
    #allocation3 [shape = 's32[1]{0}', space=sflag, size = 0x4, scoped, tag = 'scoped memory for tpu_custom_call.1']
    #allocation4 [shape = 's32[1]{0}', space=sflag, size = 0x4, scoped, tag = 'scoped memory for tpu_custom_call.1']
    #allocation5 [shape = 'u8[8192]{0}', space=vmem, size = 0x2000, scoped, tag = 'input window, operand 1, single buffered']
    #allocation6 [shape = 's32[1]{0}', space=sflag, size = 0x4, scoped, tag = 'scoped memory for tpu_custom_call.1']
    #allocation7 [shape = 'u8[512]{0}', space=smem, size = 0x200, scoped, tag = 'output window, operand 0, single buffered']
    %7 = vsyncpa [#allocation3], 0
    %8 = vsyncpa [#allocation6], 0
    %9 = vsyncpa [#allocation4], 0
    // Predicated region
    $region2: #{tpu_custom_call.1} parent=1 // pred_check
      _
    $region3: #{tpu_custom_call.1} parent=1 // pred_check_branch
      %11 = sbr.rel (0) target = $region5
    $region4: #{tpu_custom_call.1} parent=1 // pred_region
      %s13 = ssub.s32 256, 256
      %14 = vsyncadd [#allocation3], %s13
      %s15 = sshll.u32 [#allocation2], 4
      %s16 = int_to_ptr.vmem [resolvable:$true] %s15
      %21 = dma.hbm_to_vmem [thread:$0]  %s0, 256, %s16, [#allocation3], 128, 128, 8
    $region5: #{tpu_custom_call.1} parent=1 // pred_fallthru
      _
    // Predicated region
    $region6: #{tpu_custom_call.1} parent=1 // pred_check
      _
    $region7: #{tpu_custom_call.1} parent=1 // pred_check_branch
      %23 = sbr.rel (0) target = $region9
    $region8: #{tpu_custom_call.1} parent=1 // pred_region
      %s25 = ssub.s32 256, 256
      %26 = vsyncadd [#allocation6], %s25
      %s27 = sshll.u32 [#allocation5], 4
      %s28 = int_to_ptr.vmem [resolvable:$true] %s27
      %33 = dma.hbm_to_vmem [thread:$0]  %s1, 256, %s28, [#allocation6], 128, 128, 8
    $region9: #{tpu_custom_call.1} parent=1 // pred_fallthru
      _
    // Predicated region
    $region10: #{tpu_custom_call.1} parent=1 // pred_check
      _
    $region11: #{tpu_custom_call.1} parent=1 // pred_check_branch
      %35 = sbr.rel (0) target = $region13
    $region12: #{tpu_custom_call.1} parent=1 // pred_region
      %36 = dma.done [#allocation3], 256
    $region13: #{tpu_custom_call.1} parent=1 // pred_fallthru
      _
    // Predicated region
    $region14: #{tpu_custom_call.1} parent=1 // pred_check
      _
    $region15: #{tpu_custom_call.1} parent=1 // pred_check_branch
      %38 = sbr.rel (0) target = $region17
    $region16: #{tpu_custom_call.1} parent=1 // pred_region
      %39 = dma.done [#allocation6], 256
    $region17: #{tpu_custom_call.1} parent=1 // pred_fallthru
      _
    %v40 = vld [vmem:[#allocation2] sm:$0xff]
    %v41 = vld [vmem:[#allocation2 + $0x8] sm:$0xff]
    %v42 = vld [vmem:[#allocation5] sm:$0xff]
    %v43 = vld [vmem:[#allocation5 + $0x8] sm:$0xff]
    %vm44 = vcmask 261120
    %v45 = vsel %vm44, %v40, -inf
    %46 = vmax.xlane.f32.xlu0 %v45
    %v47 = vpop.xlane.xlu0 %46
    %v48 = vsel %vm44, %v41, -inf
    %49 = vmax.xlane.f32.xlu0 %v48
    %v50 = vpop.xlane.xlu0 %49
    %v51 = vsub.f32 %v40, %v47
    %v52 = vsub.f32 %v41, %v50
    %v53 = vmul.f32 %v51, 1.442695
    %v54 = vpow.pop %v53
    %v55 = vmul.f32 %v52, 1.442695
    %v56 = vpow.pop %v55
    %v57 = vsel %vm44, %v54, 0.0
    %58 = vadd.xlane.f32.xlu0 %v57
    %v59 = vpop.xlane.xlu0 %58
    %v60 = vsel %vm44, %v56, 0.0
    %61 = vadd.xlane.f32.xlu0 %v60
    %v62 = vpop.xlane.xlu0 %61
    %v63 = vlog2.pop %v59
    %v64 = vmul.f32 %v63, 0.6931472
    %v65 = vlog2.pop %v62
    %v66 = vmul.f32 %v65, 0.6931472
    %v67 = vsub.f32 %v64, %v51
    %v68 = vsub.f32 %v66, %v52
    %v69 = vmul.f32 %v42, %v67
    %v70 = vmul.f32 %v43, %v68
    %v71 = vsel %vm44, %v69, 0.0
    %v72 = vsel %vm44, %v70, 0.0
    %v73 = vadd.f32 %v71, %v72
    %74 = vadd.xlane.f32.xlu0 %v73
    %v75 = vpop.xlane.xlu0 %74
    %v76 = vrot.slane %v75, 4
    %v77 = vadd.f32 %v75, %v76
    %v78 = vrot.slane %v77, 2
    %v79 = vadd.f32 %v77, %v78
    %v80 = vrot.slane %v79, 1
    %v81 = vadd.f32 %v79, %v80
    %s82 = vtos %v81
    %v83 = vrcp.pop 16.0
    %s84 = vtos %v83
    %s85 = smul.f32 %s82, %s84
    %s86 = scalar_lea.smem [#allocation7], 0
    %87 = sst [smem:[%s86]] %s85
    // Predicated region
    $region18: #{tpu_custom_call.1} parent=1 // pred_check
      _
    $region19: #{tpu_custom_call.1} parent=1 // pred_check_branch
      %89 = sbr.rel (0) target = $region21
    $region20: #{tpu_custom_call.1} parent=1 // pred_region
      %s91 = ssub.s32 16, 16
      %92 = vsyncadd [#allocation4], %s91
      %95 = dma.smem_to_hbm [#allocation7], 16, %s2, [#allocation4]
    $region21: #{tpu_custom_call.1} parent=1 // pred_fallthru
      _
    // Predicated region
    $region22: #{tpu_custom_call.1} parent=1 // pred_check
      _
    $region23: #{tpu_custom_call.1} parent=1 // pred_check_branch
      %97 = sbr.rel (0) target = $region25
    $region24: #{tpu_custom_call.1} parent=1 // pred_region
      %98 = dma.done [#allocation4], 16
    $region25: #{tpu_custom_call.1} parent=1 // pred_fallthru
      _
    %99 = sfence
    %100 = vsyncpa [#allocation3], 1
    %101 = vsyncpa [#allocation6], 1
    %102 = vsyncpa [#allocation4], 1

</llo_original>
